<compile_context>
chip_gen: v7x
topology: tpu7x:2x2x1
jax: 0.10.0
libtpu: 0.0.40
codegen_flags: <defaults>
</compile_context>

<pallas_src>
import jax
import jax.numpy as jnp
from jax.experimental import pallas as pl
from jax.experimental.pallas import tpu as pltpu


def _concat_rows_kernel(x1_ref, x2_ref, x3_ref, o_ref):
    """All refs are VMEM tiles with shapes (R, s1)/(R, s2)/(R, s3)/(R, s1+s2+s3).

    Three lane-dense stores into disjoint column ranges of the output tile;
    the output tile writes back to HBM as a single contiguous DMA.
    """
    s1 = x1_ref.shape[1]
    s2 = x2_ref.shape[1]
    s3 = x3_ref.shape[1]
    o_ref[:, pl.ds(0, s1)] = x1_ref[...]
    o_ref[:, pl.ds(s1, s2)] = x2_ref[...]
    o_ref[:, pl.ds(s1 + s2, s3)] = x3_ref[...]


def model_forward(x1, x2, x3, *, min_pallas_bytes=0, vmem_budget_bytes=16 << 20):
    """cat((x1, x2, x3), dim=1) for NCHW tensors sharing N, H, W."""
    n, c1, h, w = x1.shape
    n2, c2, h2, w2 = x2.shape
    n3, c3, h3, w3 = x3.shape
    assert (h, w) == (h2, w2) == (h3, w3), "cat(dim=1) requires matching H, W"
    assert n2 == n and n3 == n, "cat(dim=1) requires matching N"
    assert x2.dtype == x1.dtype and x3.dtype == x1.dtype

    dtype = x1.dtype
    itemsize = jnp.dtype(dtype).itemsize
    s1, s2, s3 = c1 * h * w, c2 * h * w, c3 * h * w
    stot = s1 + s2 + s3
    ctot = c1 + c2 + c3

    # Top review item: for truly tiny copies, a custom call is pure overhead.
    # Gate the Pallas path behind a byte threshold (0 here so the kernel runs
    # in this demo script).
    if n * stot * itemsize < min_pallas_bytes:
        return jnp.concatenate([x1, x2, x3], axis=1)

    # Contiguous (free) flatten to lane-dense 2-D views: row-major NCHW means
    # concatenating along dim=1 is concatenating the flattened (C*H*W) rows.
    x1f = x1.reshape(n, s1)
    x2f = x2.reshape(n, s2)
    x3f = x3.reshape(n, s3)

    # Rows per block: keep (inputs + output) * double-buffering within the VMEM
    # budget (sized for v7x's smaller VMEM; also fine on v5e/v6e).
    bytes_per_row = 2 * stot * itemsize          # input rows + output row
    max_rows = max(1, vmem_budget_bytes // (2 * bytes_per_row))  # x2 double buffer
    if n <= 8 or n <= max_rows:
        rows_blk = n                              # single step: no pipeline overhead
    else:
        rows_blk = min(n, max_rows, 1024)
        rows_blk = max(8, (rows_blk // 8) * 8)    # sublane-aligned row blocks

    nblocks = pl.cdiv(n, rows_blk)

    out_flat = pl.pallas_call(
        _concat_rows_kernel,
        out_shape=jax.ShapeDtypeStruct((n, stot), dtype),
        grid_spec=pltpu.PrefetchScalarGridSpec(
            num_scalar_prefetch=0,
            grid=(nblocks,),
            in_specs=[
                pl.BlockSpec((rows_blk, s1), lambda i: (i, 0)),
                pl.BlockSpec((rows_blk, s2), lambda i: (i, 0)),
                pl.BlockSpec((rows_blk, s3), lambda i: (i, 0)),
            ],
            out_specs=pl.BlockSpec((rows_blk, stot), lambda i: (i, 0)),
        ),
        compiler_params=pltpu.CompilerParams(
            # Row axis is independent work -> shard across TCs on v7x megacore.
            dimension_semantics=("parallel",),
        ),
        cost_estimate=pl.CostEstimate(
            flops=0,
            transcendentals=0,
            bytes_accessed=2 * n * stot * itemsize,
        ),
    )(x1f, x2f, x3f)

    # Reshape back to NCHW (free, contiguous).
    return out_flat.reshape(n, ctot, h, w)


if __name__ == "__main__":
    key = jax.random.PRNGKey(0)
    k1, k2, k3 = jax.random.split(key, 3)

    # Small shapes consistent with the module's forward (cat along dim=1
    # requires matching N, H, W).
    x1 = jax.random.normal(k1, (2, 3, 16, 16), dtype=jnp.float32)
    x2 = jax.random.normal(k2, (2, 3, 16, 16), dtype=jnp.float32)
    x3 = jax.random.normal(k3, (2, 3, 16, 16), dtype=jnp.float32)

    out = model_forward(x1, x2, x3)
    out = jax.block_until_ready(out)

    ref = jnp.concatenate([x1, x2, x3], axis=1)
    assert out.shape == ref.shape, (out.shape, ref.shape)
    assert jnp.allclose(out, ref), "Pallas concat mismatch"

    print("KERNEL_OK")
</pallas_src>

<mosaic_0001>
module attributes {stable_mosaic.version = 11 : i64} {
  func.func @_concat_rows_kernel(%arg0: i32, %arg1: memref<2x768xf32, #tpu.memory_space<vmem>>, %arg2: memref<2x768xf32, #tpu.memory_space<vmem>>, %arg3: memref<2x768xf32, #tpu.memory_space<vmem>>, %arg4: memref<2x2304xf32, #tpu.memory_space<vmem>>) attributes {dimension_semantics = [#tpu.dimension_semantics<parallel>], iteration_bounds = array<i64: 1>, scalar_prefetch = 0 : i64, scratch_operands = 0 : i64, tpu.core_type = #tpu.core_type<tc>, window_params = [{transform_indices = @transform_0, window_bounds = array<i64: 2, 768>}, {transform_indices = @transform_1, window_bounds = array<i64: 2, 768>}, {transform_indices = @transform_2, window_bounds = array<i64: 2, 768>}, {transform_indices = @transform_3, window_bounds = array<i64: 2, 2304>}]} {
    %c0 = arith.constant 0 : index
    %c0_0 = arith.constant 0 : index
    %0 = vector.load %arg1[%c0, %c0_0] : memref<2x768xf32, #tpu.memory_space<vmem>>, vector<2x768xf32>
    %c0_1 = arith.constant 0 : index
    %c0_2 = arith.constant 0 : index
    %1 = vector.load %arg4[%c0_1, %c0_2] : memref<2x2304xf32, #tpu.memory_space<vmem>>, vector<2x768xf32>
    tpu.vector_store %arg4[%c0_1, %c0_2], %0 {strides = array<i32>} : memref<2x2304xf32, #tpu.memory_space<vmem>>, vector<2x768xf32>,
    %c0_3 = arith.constant 0 : index
    %c0_4 = arith.constant 0 : index
    %2 = vector.load %arg2[%c0_3, %c0_4] : memref<2x768xf32, #tpu.memory_space<vmem>>, vector<2x768xf32>
    %c0_5 = arith.constant 0 : index
    %c768 = arith.constant 768 : index
    %3 = vector.load %arg4[%c0_5, %c768] : memref<2x2304xf32, #tpu.memory_space<vmem>>, vector<2x768xf32>
    tpu.vector_store %arg4[%c0_5, %c768], %2 {strides = array<i32>} : memref<2x2304xf32, #tpu.memory_space<vmem>>, vector<2x768xf32>,
    %c0_6 = arith.constant 0 : index
    %c0_7 = arith.constant 0 : index
    %4 = vector.load %arg3[%c0_6, %c0_7] : memref<2x768xf32, #tpu.memory_space<vmem>>, vector<2x768xf32>
    %c0_8 = arith.constant 0 : index
    %c1536 = arith.constant 1536 : index
    %5 = vector.load %arg4[%c0_8, %c1536] : memref<2x2304xf32, #tpu.memory_space<vmem>>, vector<2x768xf32>
    tpu.vector_store %arg4[%c0_8, %c1536], %4 {strides = array<i32>} : memref<2x2304xf32, #tpu.memory_space<vmem>>, vector<2x768xf32>,
    return
  }
  func.func @transform_0(%arg0: i32) -> (i32, i32) {
    %c0_i32 = arith.constant 0 : i32
    %c0_i32_0 = arith.constant 0 : i32
    return %arg0, %c0_i32 : i32, i32
  }
  func.func @transform_1(%arg0: i32) -> (i32, i32) {
    %c0_i32 = arith.constant 0 : i32
    %c0_i32_0 = arith.constant 0 : i32
    return %arg0, %c0_i32 : i32, i32
  }
  func.func @transform_2(%arg0: i32) -> (i32, i32) {
    %c0_i32 = arith.constant 0 : i32
    %c0_i32_0 = arith.constant 0 : i32
    return %arg0, %c0_i32 : i32, i32
  }
  func.func @transform_3(%arg0: i32) -> (i32, i32) {
    %c0_i32 = arith.constant 0 : i32
    %c0_i32_0 = arith.constant 0 : i32
    return %arg0, %c0_i32 : i32, i32
  }
}

</mosaic_0001>

<llo_original>
// kernel: tpu_custom_call.1
$region0: #{tpu_custom_call.1}
  #allocation0 [shape = 'u32[]', space=smem, size = 0x4, offset = 0x4, fixed_abs, tag = 'smem constant byte address 0x4 - core index']
  #allocation1 [shape = 'u32[144,128]{1,0:T(1,128)}', space=vmem, size = 0x12000, scoped, tag = 'internal scratch']
  %s0 = inlined_call_operand.hbm [shape: f32[2,768], index: 0, kind: input, shape index: {}]
  %s1 = inlined_call_operand.hbm [shape: f32[2,768], index: 1, kind: input, shape index: {}]
  %s2 = inlined_call_operand.hbm [shape: f32[2,768], index: 2, kind: input, shape index: {}]
  %s3 = inlined_call_operand.hbm [shape: f32[2,2304], index: 3, kind: output, shape index: {}]
  %s4 = sld [smem:[#allocation0]]
  $region34: #{tpu_custom_call.1} parent=0
    _
  %s6 = ssub.s32 1, %s4
  %s7 = scalar_select 0, %s6, %s4
  $region1: #{tpu_custom_call.1} parent=0
    #allocation2 [shape = 'u8[6144]{0}', space=vmem, size = 0x1800, scoped, tag = 'input window, operand 0, single buffered']
    #allocation3 [shape = 's32[1]{0}', space=sflag, size = 0x4, scoped, tag = 'scoped memory for tpu_custom_call.1']
    #allocation4 [shape = 's32[1]{0}', space=sflag, size = 0x4, scoped, tag = 'scoped memory for tpu_custom_call.1']
    #allocation5 [shape = 'u8[6144]{0}', space=vmem, size = 0x1800, scoped, tag = 'input window, operand 1, single buffered']
    #allocation6 [shape = 's32[1]{0}', space=sflag, size = 0x4, scoped, tag = 'scoped memory for tpu_custom_call.1']
    #allocation7 [shape = 'u8[6144]{0}', space=vmem, size = 0x1800, scoped, tag = 'input window, operand 2, single buffered']
    #allocation8 [shape = 'u8[18432]{0}', space=vmem, size = 0x4800, scoped, tag = 'output window, operand 0, single buffered']
    %8 = vsyncpa [#allocation3], 0
    %9 = vsyncpa [#allocation6], 0
    %10 = vsyncpa [#allocation4], 0
    // Predicated region
    $region2: #{tpu_custom_call.1} parent=1 // pred_check
      _
    $region3: #{tpu_custom_call.1} parent=1 // pred_check_branch
      %12 = sbr.rel (0) target = $region5
    $region4: #{tpu_custom_call.1} parent=1 // pred_region
      %s14 = ssub.s32 192, 192
      %15 = vsyncadd [#allocation3], %s14
      %s17 = sshll.u32 [#allocation2], 4
      %s18 = int_to_ptr.vmem [resolvable:$true] %s17
      %20 = dma.hbm_to_vmem [thread:$0]  %s0, 192, %s18, [#allocation3]
    $region5: #{tpu_custom_call.1} parent=1 // pred_fallthru
      _
    // Predicated region
    $region6: #{tpu_custom_call.1} parent=1 // pred_check
      _
    $region7: #{tpu_custom_call.1} parent=1 // pred_check_branch
      %22 = sbr.rel (0) target = $region9
    $region8: #{tpu_custom_call.1} parent=1 // pred_region
      %s24 = ssub.s32 192, 192
      %25 = vsyncadd [#allocation6], %s24
      %s27 = sshll.u32 [#allocation5], 4
      %s28 = int_to_ptr.vmem [resolvable:$true] %s27
      %30 = dma.hbm_to_vmem [thread:$0]  %s1, 192, %s28, [#allocation6]
    $region9: #{tpu_custom_call.1} parent=1 // pred_fallthru
      _
    // Predicated region
    $region10: #{tpu_custom_call.1} parent=1 // pred_check
      _
    $region11: #{tpu_custom_call.1} parent=1 // pred_check_branch
      %32 = sbr.rel (0) target = $region13
    $region12: #{tpu_custom_call.1} parent=1 // pred_region
      %s34 = ssub.s32 192, 192
      %35 = vsyncadd [#allocation6], %s34
      %s37 = sshll.u32 [#allocation7], 4
      %s38 = int_to_ptr.vmem [resolvable:$true] %s37
      %40 = dma.hbm_to_vmem [thread:$0]  %s2, 192, %s38, [#allocation6]
    $region13: #{tpu_custom_call.1} parent=1 // pred_fallthru
      _
    // Predicated region
    $region14: #{tpu_custom_call.1} parent=1 // pred_check
      _
    $region15: #{tpu_custom_call.1} parent=1 // pred_check_branch
      %42 = sbr.rel (0) target = $region17
    $region16: #{tpu_custom_call.1} parent=1 // pred_region
      %43 = dma.done [#allocation3], 192
    $region17: #{tpu_custom_call.1} parent=1 // pred_fallthru
      _
    // Predicated region
    $region18: #{tpu_custom_call.1} parent=1 // pred_check
      _
    $region19: #{tpu_custom_call.1} parent=1 // pred_check_branch
      %45 = sbr.rel (0) target = $region21
    $region20: #{tpu_custom_call.1} parent=1 // pred_region
      %46 = dma.done [#allocation6], 192
    $region21: #{tpu_custom_call.1} parent=1 // pred_fallthru
      _
    // Predicated region
    $region22: #{tpu_custom_call.1} parent=1 // pred_check
      _
    $region23: #{tpu_custom_call.1} parent=1 // pred_check_branch
      %48 = sbr.rel (0) target = $region25
    $region24: #{tpu_custom_call.1} parent=1 // pred_region
      %49 = dma.done [#allocation6], 192
    $region25: #{tpu_custom_call.1} parent=1 // pred_fallthru
      _
    %v50 = vld [vmem:[#allocation2] sm:$0xff]
    %v51 = vld [vmem:[#allocation2 + $0x8] sm:$0xf]
    %52 = vst [vmem:[#allocation8] sm:$0xff] %v50
    %53 = vst [vmem:[#allocation8 + $0x8] sm:$0xf] %v51
    %v54 = vld [vmem:[#allocation5] sm:$0xff]
    %v55 = vld [vmem:[#allocation5 + $0x8] sm:$0xf]
    %56 = vst [vmem:[#allocation8 + $0xc] sm:$0xff] %v54
    %57 = vst [vmem:[#allocation8 + $0x14] sm:$0xf] %v55
    %v58 = vld [vmem:[#allocation7] sm:$0xff]
    %v59 = vld [vmem:[#allocation7 + $0x8] sm:$0xf]
    %60 = vst [vmem:[#allocation8 + $0x18] sm:$0xff] %v58
    %61 = vst [vmem:[#allocation8 + $0x20] sm:$0xf] %v59
    // Predicated region
    $region26: #{tpu_custom_call.1} parent=1 // pred_check
      _
    $region27: #{tpu_custom_call.1} parent=1 // pred_check_branch
      %63 = sbr.rel (0) target = $region29
    $region28: #{tpu_custom_call.1} parent=1 // pred_region
      %s65 = ssub.s32 576, 576
      %66 = vsyncadd [#allocation4], %s65
      %s68 = sshll.u32 [#allocation8], 4
      %s69 = int_to_ptr.vmem [resolvable:$true] %s68
      %71 = dma.vmem_to_hbm [thread:$0]  %s69, 576, %s3, [#allocation4]
    $region29: #{tpu_custom_call.1} parent=1 // pred_fallthru
      _
    // Predicated region
    $region30: #{tpu_custom_call.1} parent=1 // pred_check
      _
    $region31: #{tpu_custom_call.1} parent=1 // pred_check_branch
      %73 = sbr.rel (0) target = $region33
    $region32: #{tpu_custom_call.1} parent=1 // pred_region
      %74 = dma.done [#allocation4], 576
    $region33: #{tpu_custom_call.1} parent=1 // pred_fallthru
      _
    %75 = vsyncpa [#allocation3], 1
    %76 = vsyncpa [#allocation6], 1
    %77 = vsyncpa [#allocation4], 1

</llo_original>
